<compile_context>
chip_gen: v7x
topology: tpu7x:2x2x1
jax: 0.10.0
libtpu: 0.0.40
codegen_flags: <defaults>
</compile_context>

<pallas_src>
import functools

import jax
import jax.numpy as jnp
from jax.experimental import pallas as pl
from jax.experimental.pallas import tpu as pltpu


def _round_up(x, m):
    return ((x + m - 1) // m) * m


def _cdiv(a, b):
    return (a + b - 1) // b


def _vmem_capacity_bytes():
    """Per-core VMEM capacity; conservative (v7x per-TC) fallback."""
    try:
        info = pltpu.get_tpu_info()
        cap = getattr(info, "vmem_capacity_bytes", None)
        if cap:
            return int(cap)
    except Exception:
        pass
    return 64 * 1024 * 1024


def _layernorm_kernel(*refs, eps, center, scale, n_valid):
    # refs = (x_ref, [scale_ref], [center_ref], o_ref)
    idx = 0
    x_ref = refs[idx]; idx += 1
    scale_ref = None
    if scale:
        scale_ref = refs[idx]; idx += 1
    center_ref = None
    if center:
        center_ref = refs[idx]; idx += 1
    o_ref = refs[idx]

    x = x_ref[...].astype(jnp.float32)                 # (tb, Fp)
    f_pad = x.shape[-1]

    # Padded feature lanes hold zeros, so the plain sum is already the sum
    # over the true n_valid features.
    mean = jnp.sum(x, axis=-1, keepdims=True) * (1.0 / n_valid)   # (tb, 1)
    d = x - mean
    sq = d * d
    if n_valid != f_pad:
        # (0 - mean)^2 in the padded lanes would corrupt the variance — mask.
        lane = jax.lax.broadcasted_iota(jnp.int32, (1, f_pad), 1)
        sq = jnp.where(lane < n_valid, sq, 0.0)
    # torch.std default: Bessel-corrected variance (divide by N-1).
    var = jnp.sum(sq, axis=-1, keepdims=True) * (1.0 / (n_valid - 1))
    std = jnp.sqrt(var)

    # One per-row reciprocal + broadcast multiply instead of F divides per
    # row.  approx=False keeps exact f32 numerics (1e-5 tolerance vs ref).
    inv = pl.reciprocal(std + eps, approx=False)       # (tb, 1)
    out = d * inv

    if scale:
        out = out * scale_ref[...]                     # (1, Fp) f32 broadcast
    if center:
        out = out + center_ref[...]                    # (1, Fp) f32 broadcast
    o_ref[...] = out.astype(o_ref.dtype)


def _pick_row_tile(batch, features_padded, in_dtype, vmem_cap_bytes):
    """Sublane-aligned row tile sized from this generation's VMEM, aiming for
    ~4-8 MiB blocks and >=4 (even) grid steps when the batch allows."""
    itemsize = jnp.dtype(in_dtype).itemsize
    sub = max(8, 32 // max(1, itemsize))       # 8 (f32), 16 (bf16), 32 (int8)

    # Live VMEM per block row:
    #   2x double-buffered input + 2x double-buffered output (native dtype)
    #   + ~3 full-tile f32 temporaries inside the kernel (upcast x, d, out)
    # — the f32 temporaries are what actually cap tile size for narrow dtypes.
    per_row_bytes = features_padded * (4 * itemsize + 3 * 4)

    # ~40% of this chip's VMEM for the whole working set, capped so a single
    # block stays in the 4-8 MiB sweet spot.  (v5e/v6e: ~51 MiB working set,
    # v7x: ~26 MiB — well under 64 MiB per-TC.)
    budget = min(int(vmem_cap_bytes * 0.4), 56 * 1024 * 1024)
    rt = max(sub, (budget // max(1, per_row_bytes)) // sub * sub)

    b_rounded = _round_up(batch, sub)
    rt = min(rt, b_rounded)

    max_steps = b_rounded // sub
    steps = _cdiv(b_rounded, rt)
    # >=4 steps gives each v7x TensorCore (grid is "parallel"-sharded) a real
    # pipeline steady state; an even count avoids one core taking an extra
    # trailing step.  Best effort — never below one tile per sublane group.
    if max_steps >= 4 and steps < 4:
        steps = 4
    if steps % 2 == 1 and steps + 1 <= max_steps:
        steps += 1
    if steps > 1:
        target = 4 if max_steps >= 4 else 2
        rt_ceil = _round_up(_cdiv(b_rounded, steps), sub)
        if _cdiv(b_rounded, rt_ceil) >= min(target, steps):
            rt = rt_ceil
        else:
            rt = max(sub, (b_rounded // steps) // sub * sub)
    return rt


def layer_norm(x, center_param=None, scale_param=None, *, eps=1e-6,
               center=True, scale=False, row_tile=None, pad_features=True):
    """x: (B, F). center_param/scale_param: (F,) arrays (used per flags)."""
    B, F = x.shape
    assert F >= 2, "torch.std is Bessel-corrected; features must be >= 2"
    if center:
        assert center_param is not None and center_param.shape == (F,)
    if scale:
        assert scale_param is not None and scale_param.shape == (F,)

    # Lane-dense feature dim: pad F up to a multiple of 128 so stores are
    # unmasked full-lane vst (stats are masked to the true F in-kernel).
    F_pad = _round_up(F, 128) if pad_features else F
    if F_pad != F:
        x_in = jnp.pad(x, ((0, 0), (0, F_pad - F)))
    else:
        x_in = x

    vmem_cap = _vmem_capacity_bytes()
    if row_tile is None:
        row_tile = _pick_row_tile(B, F_pad, x.dtype, vmem_cap)

    kernel = functools.partial(_layernorm_kernel, eps=eps, center=center,
                               scale=scale, n_valid=F)

    in_specs = [pl.BlockSpec((row_tile, F_pad), lambda i: (i, 0))]
    args = [x_in]
    if scale:
        sp = scale_param.astype(jnp.float32).reshape(1, F)
        if F_pad != F:
            sp = jnp.pad(sp, ((0, 0), (0, F_pad - F)))
        in_specs.append(pl.BlockSpec((1, F_pad), lambda i: (0, 0)))
        args.append(sp)
    if center:
        cp = center_param.astype(jnp.float32).reshape(1, F)
        if F_pad != F:
            cp = jnp.pad(cp, ((0, 0), (0, F_pad - F)))
        in_specs.append(pl.BlockSpec((1, F_pad), lambda i: (0, 0)))
        args.append(cp)

    out = pl.pallas_call(
        kernel,
        out_shape=jax.ShapeDtypeStruct((B, F_pad), x.dtype),
        grid_spec=pltpu.PrefetchScalarGridSpec(
            num_scalar_prefetch=0,
            # cdiv grid: ragged last block is fine — rows are independent;
            # out-of-bounds rows are read as garbage and their writes dropped.
            grid=(pl.cdiv(B, row_tile),),
            in_specs=in_specs,
            out_specs=pl.BlockSpec((row_tile, F_pad), lambda i: (i, 0)),
        ),
        compiler_params=pltpu.CompilerParams(
            # Independent row blocks -> shard across TensorCores (v7x
            # megacore) and let Pallas double-buffer the DMA pipeline.
            dimension_semantics=("parallel",),
            # Raise the scoped-VMEM limit to cover the larger blocks while
            # always staying <= 75% of this generation's physical VMEM.
            vmem_limit_bytes=int(min(vmem_cap * 3 // 4, 100 * 1024 * 1024)),
        ),
    )(*args)

    if F_pad != F:
        out = out[:, :F]
    return out


if __name__ == "__main__":
    def ref_layer_norm(x, cp=None, sp=None, eps=1e-6):
        n = x.shape[-1]
        mean = jnp.mean(x, axis=-1, keepdims=True)
        std = jnp.sqrt(jnp.sum((x - mean) ** 2, axis=-1, keepdims=True) / (n - 1))
        out = (x - mean) / (std + eps)
        if sp is not None:
            out = out * sp
        if cp is not None:
            out = out + cp
        return out

    k1, k2, k3, k4 = jax.random.split(jax.random.PRNGKey(0), 4)

    # Case 1: module defaults (center=True, scale=False), hidden=32 ->
    # exercises the padded (F -> 128) lane-dense path with masked variance.
    F = 32
    cp = jnp.zeros((F,), dtype=jnp.float32)
    B = 8
    x = jax.random.normal(k1, (B, F), dtype=jnp.float32)
    out = jax.block_until_ready(layer_norm(x, cp, eps=1e-6))
    assert jnp.allclose(out, ref_layer_norm(x, cp), atol=1e-5, rtol=1e-5), \
        "mismatch vs reference (B=8, F=32)"

    # Case 2: ragged batch (not a multiple of the chosen row tile).
    B2 = 20
    x2 = jax.random.normal(k2, (B2, F), dtype=jnp.float32)
    out2 = jax.block_until_ready(layer_norm(x2, cp, eps=1e-6))
    assert jnp.allclose(out2, ref_layer_norm(x2, cp), atol=1e-5, rtol=1e-5), \
        "mismatch vs reference (B=20, ragged grid)"

    # Case 3: lane-dense F (multiple of 128), scale + center enabled,
    # multi-step grid.
    F3, B3 = 256, 64
    x3 = jax.random.normal(k3, (B3, F3), dtype=jnp.float32)
    cp3 = 0.1 * jax.random.normal(k4, (F3,), dtype=jnp.float32)
    sp3 = 1.5 * jnp.ones((F3,), dtype=jnp.float32)
    out3 = jax.block_until_ready(
        layer_norm(x3, cp3, sp3, eps=1e-6, center=True, scale=True))
    assert jnp.allclose(out3, ref_layer_norm(x3, cp3, sp3), atol=1e-5,
                        rtol=1e-5), "mismatch vs reference (B=64, F=256)"

    print("KERNEL_OK")
</pallas_src>

<mosaic_0001>
module attributes {stable_mosaic.version = 11 : i64} {
  func.func @_layernorm_kernel(%arg0: i32, %arg1: memref<8x128xf32, #tpu.memory_space<vmem>>, %arg2: memref<1x128xf32, #tpu.memory_space<vmem>>, %arg3: memref<8x128xf32, #tpu.memory_space<vmem>>) attributes {dimension_semantics = [#tpu.dimension_semantics<parallel>], iteration_bounds = array<i64: 1>, scalar_prefetch = 0 : i64, scratch_operands = 0 : i64, tpu.core_type = #tpu.core_type<tc>, window_params = [{transform_indices = @transform_0, window_bounds = array<i64: 8, 128>}, {pipeline_mode = #tpu.pipeline_mode<synchronous>, transform_indices = @transform_1, window_bounds = array<i64: 1, 128>}, {transform_indices = @transform_2, window_bounds = array<i64: 8, 128>}]} {
    %c0 = arith.constant 0 : index
    %c0_0 = arith.constant 0 : index
    %0 = vector.load %arg1[%c0, %c0_0] : memref<8x128xf32, #tpu.memory_space<vmem>>, vector<8x128xf32>
    %cst = arith.constant dense<0.000000e+00> : vector<8xf32>
    %1 = vector.multi_reduction <add>, %0, %cst [1] : vector<8x128xf32> to vector<8xf32>
    %2 = vector.shape_cast %1 : vector<8xf32> to vector<8x1xf32>
    %cst_1 = arith.constant 3.125000e-02 : f32
    %3 = vector.broadcast %cst_1 : f32 to vector<8x1xf32>
    %4 = arith.mulf %2, %3 : vector<8x1xf32>
    %5 = vector.broadcast %4 : vector<8x1xf32> to vector<8x128xf32>
    %6 = arith.subf %0, %5 : vector<8x128xf32>
    %7 = arith.mulf %6, %6 : vector<8x128xf32>
    %8 = tpu.iota {dimensions = array<i32: 1>} : vector<1x128xi32>
    %c32_i32 = arith.constant 32 : i32
    %9 = vector.broadcast %c32_i32 : i32 to vector<1x128xi32>
    %10 = arith.cmpi slt, %8, %9 : vector<1x128xi32>
    %cst_2 = arith.constant 0.000000e+00 : f32
    %11 = vector.shape_cast %10 : vector<1x128xi1> to vector<1x128xi1>
    %12 = vector.broadcast %11 : vector<1x128xi1> to vector<8x128xi1>
    %13 = vector.broadcast %cst_2 : f32 to vector<8x128xf32>
    %14 = arith.select %12, %7, %13 : vector<8x128xi1>, vector<8x128xf32>
    %cst_3 = arith.constant dense<0.000000e+00> : vector<8xf32>
    %15 = vector.multi_reduction <add>, %14, %cst_3 [1] : vector<8x128xf32> to vector<8xf32>
    %16 = vector.shape_cast %15 : vector<8xf32> to vector<8x1xf32>
    %cst_4 = arith.constant 0.0322580636 : f32
    %17 = vector.broadcast %cst_4 : f32 to vector<8x1xf32>
    %18 = arith.mulf %16, %17 : vector<8x1xf32>
    %19 = math.sqrt %18 : vector<8x1xf32>
    %cst_5 = arith.constant 9.99999997E-7 : f32
    %20 = vector.broadcast %cst_5 : f32 to vector<8x1xf32>
    %21 = arith.addf %19, %20 : vector<8x1xf32>
    %22 = tpu.reciprocal %21 : vector<8x1xf32> -> vector<8x1xf32>
    %23 = vector.broadcast %22 : vector<8x1xf32> to vector<8x128xf32>
    %24 = arith.mulf %6, %23 : vector<8x128xf32>
    %c0_6 = arith.constant 0 : index
    %c0_7 = arith.constant 0 : index
    %25 = vector.load %arg2[%c0_6, %c0_7] : memref<1x128xf32, #tpu.memory_space<vmem>>, vector<1x128xf32>
    %26 = vector.broadcast %25 : vector<1x128xf32> to vector<8x128xf32>
    %27 = arith.addf %24, %26 : vector<8x128xf32>
    %c0_8 = arith.constant 0 : index
    %c0_9 = arith.constant 0 : index
    %28 = vector.load %arg3[%c0_8, %c0_9] : memref<8x128xf32, #tpu.memory_space<vmem>>, vector<8x128xf32>
    tpu.vector_store %arg3[%c0_8, %c0_9], %27 {strides = array<i32>} : memref<8x128xf32, #tpu.memory_space<vmem>>, vector<8x128xf32>,
    return
  }
  func.func @transform_0(%arg0: i32) -> (i32, i32) {
    %c0_i32 = arith.constant 0 : i32
    %c0_i32_0 = arith.constant 0 : i32
    return %arg0, %c0_i32 : i32, i32
  }
  func.func @transform_1(%arg0: i32) -> (i32, i32) {
    %c0_i32 = arith.constant 0 : i32
    %c0_i32_0 = arith.constant 0 : i32
    %c0_i32_1 = arith.constant 0 : i32
    return %c0_i32, %c0_i32_0 : i32, i32
  }
  func.func @transform_2(%arg0: i32) -> (i32, i32) {
    %c0_i32 = arith.constant 0 : i32
    %c0_i32_0 = arith.constant 0 : i32
    return %arg0, %c0_i32 : i32, i32
  }
}

</mosaic_0001>

<llo_original>
// kernel: tpu_custom_call.1
$region0: #{tpu_custom_call.1}
  #allocation0 [shape = 'u32[]', space=smem, size = 0x4, offset = 0x4, fixed_abs, tag = 'smem constant byte address 0x4 - core index']
  #allocation1 [shape = 'u32[144,128]{1,0:T(1,128)}', space=vmem, size = 0x12000, scoped, tag = 'internal scratch']
  %s0 = inlined_call_operand.hbm [shape: f32[8,128], index: 0, kind: input, shape index: {}]
  %s1 = inlined_call_operand.vmem [shape: f32[1,128], index: 1, kind: input, shape index: {}]
  %s2 = inlined_call_operand.hbm [shape: f32[8,128], index: 2, kind: output, shape index: {}]
  %s3 = sld [smem:[#allocation0]]
  $region22: #{tpu_custom_call.1} parent=0
    _
  %s5 = ssub.s32 1, %s3
  %s6 = scalar_select 0, %s5, %s3
  $region1: #{tpu_custom_call.1} parent=0
    #allocation2 [shape = 'u8[4096]{0}', space=vmem, size = 0x1000, scoped, tag = 'input window, operand 0, single buffered']
    #allocation3 [shape = 's32[1]{0}', space=sflag, size = 0x4, scoped, tag = 'scoped memory for tpu_custom_call.1']
    #allocation4 [shape = 's32[1]{0}', space=sflag, size = 0x4, scoped, tag = 'scoped memory for tpu_custom_call.1']
    #allocation5 [shape = 'u8[4096]{0}', space=vmem, size = 0x1000, scoped, tag = 'output window, operand 0, single buffered']
    %7 = vsyncpa [#allocation3], 0
    %8 = vsyncpa [#allocation4], 0
    // Predicated region
    $region2: #{tpu_custom_call.1} parent=1 // pred_check
      _
    $region3: #{tpu_custom_call.1} parent=1 // pred_check_branch
      %10 = sbr.rel (0) target = $region5
    $region4: #{tpu_custom_call.1} parent=1 // pred_region
      %s12 = ssub.s32 128, 128
      %13 = vsyncadd [#allocation3], %s12
      %s15 = sshll.u32 [#allocation2], 4
      %s16 = int_to_ptr.vmem [resolvable:$true] %s15
      %18 = dma.hbm_to_vmem [thread:$0]  %s0, 128, %s16, [#allocation3]
    $region5: #{tpu_custom_call.1} parent=1 // pred_fallthru
      _
    // Predicated region
    $region6: #{tpu_custom_call.1} parent=1 // pred_check
      _
    $region7: #{tpu_custom_call.1} parent=1 // pred_check_branch
      %20 = sbr.rel (0) target = $region9
    $region8: #{tpu_custom_call.1} parent=1 // pred_region
      _
    $region9: #{tpu_custom_call.1} parent=1 // pred_fallthru
      _
    // Predicated region
    $region10: #{tpu_custom_call.1} parent=1 // pred_check
      _
    $region11: #{tpu_custom_call.1} parent=1 // pred_check_branch
      %22 = sbr.rel (0) target = $region13
    $region12: #{tpu_custom_call.1} parent=1 // pred_region
      %23 = dma.done [#allocation3], 128
    $region13: #{tpu_custom_call.1} parent=1 // pred_fallthru
      _
    %v24 = vld [vmem:[#allocation2] sm:$0xff]
    %25 = vadd.xlane.f32.xlu0 %v24
    %v26 = vpop.xlane.xlu0 %25
    %v27 = vmul.f32 %v26, 0.03125
    %v28 = vsub.f32 %v24, %v27
    %v29 = vmul.f32 %v28, %v28
    %v30 = vlaneseq
    %v31 = vand.u32 %v30, 127
    %vm32 = vcmp.lt.s32.totalorder %v31, 32
    %v33 = vsel %vm32, 1, 0
    %vm34 = vcmp.eq.s32.totalorder %v33, 1
    %v35 = vsel %vm34, %v29, 0.0
    %36 = vadd.xlane.f32.xlu0 %v35
    %v37 = vpop.xlane.xlu0 %36
    %v38 = vmul.f32 %v37, 0.032258064
    %v39 = vrsqrt.pop %v38
    %v40 = vmul.f32 %v38, %v39
    %vm41 = vcmp.eq.f32.partialorder %v38, inf
    %v42 = vsel %vm41, %v38, %v40
    %vm43 = vcmp.eq.f32.partialorder %v38, 0.0
    %v44 = vand.u32 %v38, 2147483648
    %v45 = vsel %vm43, %v44, %v42
    %v46 = vadd.f32 %v45, 1e-06
    %v47 = vrcp.pop %v46
    %v48 = vmul.f32 %v28, %v47
    %v49 = vld [vmem:[%s1] sm:$0x1]
    %v51 = vlaneseq
    %v52 = vshrl.u32 %v51, 7
    %v53 = vsub.s32 0, %v52
    %v54 = vrot.slane %v49, %v53
    %v56 = vadd.f32 %v48, %v54
    %57 = vst [vmem:[#allocation5] sm:$0xff] %v56
    // Predicated region
    $region14: #{tpu_custom_call.1} parent=1 // pred_check
      _
    $region15: #{tpu_custom_call.1} parent=1 // pred_check_branch
      %59 = sbr.rel (0) target = $region17
    $region16: #{tpu_custom_call.1} parent=1 // pred_region
      %s61 = ssub.s32 128, 128
      %62 = vsyncadd [#allocation4], %s61
      %s64 = sshll.u32 [#allocation5], 4
      %s65 = int_to_ptr.vmem [resolvable:$true] %s64
      %67 = dma.vmem_to_hbm [thread:$0]  %s65, 128, %s2, [#allocation4]
    $region17: #{tpu_custom_call.1} parent=1 // pred_fallthru
      _
    // Predicated region
    $region18: #{tpu_custom_call.1} parent=1 // pred_check
      _
    $region19: #{tpu_custom_call.1} parent=1 // pred_check_branch
      %69 = sbr.rel (0) target = $region21
    $region20: #{tpu_custom_call.1} parent=1 // pred_region
      %70 = dma.done [#allocation4], 128
    $region21: #{tpu_custom_call.1} parent=1 // pred_fallthru
      _
    %71 = vsyncpa [#allocation3], 1
    %72 = vsyncpa [#allocation4], 1

</llo_original>
